<compile_context>
chip_gen: v7x
topology: tpu7x:2x2x1
jax: 0.10.0
libtpu: 0.0.40
codegen_flags: <defaults>
</compile_context>

<pallas_src>
import functools
import math

import jax
import jax.numpy as jnp
from jax import lax
from jax.experimental import pallas as pl
from jax.experimental.pallas import tpu as pltpu

THETA = 3.0

# Per-input block budget (each of the 2 inputs is double-buffered by the
# pipeline, so total block VMEM ~ 4x this; well under the 32 MiB default
# scoped limit on every chip generation).
_TARGET_BLOCK_BYTES = 2 << 20


def _boundary_loss_kernel(pred_ref, target_ref, out_ref, *,
                          theta, h, n_images, tb, mask_tail):
    """One grid step: TB images, flattened to a (TB*H, W) sublane-major tile."""
    c = pl.program_id(0)

    p = jax.nn.sigmoid(pred_ref[...].astype(jnp.float32))   # (TB*H, W)
    t = target_ref[...].astype(jnp.float32)                 # (TB*H, W)

    R, W = p.shape                                           # R = tb * h

    # Edge masks, computed ONCE per block and reused for both Laplacians.
    # Row index inside each image = global row % H (images are stacked along
    # the sublane axis), so masks also kill cross-image leakage from rolls.
    ri = lax.broadcasted_iota(jnp.int32, (R, W), 0)
    ci = lax.broadcasted_iota(jnp.int32, (R, W), 1)
    row_in_img = ri % h
    m_n = (row_in_img > 0).astype(jnp.float32)
    m_s = (row_in_img < h - 1).astype(jnp.float32)
    m_w = (ci > 0).astype(jnp.float32)
    m_e = (ci < W - 1).astype(jnp.float32)

    def lap(x):
        # result[i, j] needs x[i-1, j], x[i+1, j], x[i, j-1], x[i, j+1],
        # treated as 0 outside the image (zero-padded conv2d).
        north = m_n * pltpu.roll(x, 1,     axis=0)   # x[i-1, j]
        south = m_s * pltpu.roll(x, R - 1, axis=0)   # x[i+1, j]
        west  = m_w * pltpu.roll(x, 1,     axis=1)   # x[i, j-1]
        east  = m_e * pltpu.roll(x, W - 1, axis=1)   # x[i, j+1]
        return north + south + west + east - 4.0 * x

    pred_boundary = lap(p)
    target_boundary = lap(t)

    weight = jnp.exp(theta * jnp.abs(target_boundary))
    diff = pred_boundary - target_boundary
    contrib = weight * diff * diff

    if mask_tail:
        # Zero out images padded beyond the true batch size (last chunk only).
        img = c * tb + ri // h
        contrib = jnp.where(img < n_images, contrib, 0.0)

    # Lane-dense partial sums: reduce only over the sublane axis; the final
    # (tiny) reduction across lanes and chunks happens in the wrapper.
    out_ref[...] = jnp.sum(contrib, axis=0, keepdims=True)


def boundary_loss(pred, target, theta=THETA):
    """Pallas implementation of BoundaryLoss.forward. Inputs are NCHW, C == 1."""
    N, C, H, W = pred.shape
    assert C == 1, "Laplacian conv weight is (1,1,3,3) -> single channel only"
    assert target.shape == pred.shape

    # Flatten batch (+channel) into the sublane-major axis: (N*H, W).
    p2 = pred.reshape(N * H, W)
    t2 = target.reshape(N * H, W)

    # --- choose images-per-block (TB) ---
    bytes_per_img = H * W * jnp.dtype(pred.dtype).itemsize
    tb = max(1, min(N, _TARGET_BLOCK_BYTES // max(bytes_per_img, 1)))
    if tb < N:
        # Keep the block's sublane extent (tb*H) a multiple of 8 (f32 vreg
        # tiling) when the block does not cover the whole array.
        f = 8 // math.gcd(H, 8)
        tb = ((tb + f - 1) // f) * f
    num_chunks = pl.cdiv(N, tb)
    n_pad = num_chunks * tb
    mask_tail = n_pad != N
    if mask_tail:
        pad_rows = (n_pad - N) * H
        p2 = jnp.pad(p2, ((0, pad_rows), (0, 0)))
        t2 = jnp.pad(t2, ((0, pad_rows), (0, 0)))

    kernel = functools.partial(
        _boundary_loss_kernel,
        theta=float(theta), h=H, n_images=N, tb=tb, mask_tail=mask_tail)

    partials = pl.pallas_call(
        kernel,
        out_shape=jax.ShapeDtypeStruct((num_chunks, W), jnp.float32),
        grid_spec=pltpu.PrefetchScalarGridSpec(
            num_scalar_prefetch=0,
            grid=(num_chunks,),
            in_specs=[
                pl.BlockSpec((tb * H, W), lambda c: (c, 0)),
                pl.BlockSpec((tb * H, W), lambda c: (c, 0)),
            ],
            out_specs=pl.BlockSpec((1, W), lambda c: (c, 0)),
        ),
        compiler_params=pltpu.CompilerParams(
            # Independent chunks -> shardable across TensorCores (v7x).
            dimension_semantics=("parallel",)),
    )(p2, t2)

    total = jnp.sum(partials)
    return (total / jnp.float32(N * C * H * W)).astype(jnp.float32)


def boundary_loss_ref(pred, target, theta=THETA):
    """Plain-JAX reference (mirrors the PyTorch module) for correctness check."""
    k = jnp.array([[0., 1., 0.], [1., -4., 1.], [0., 1., 0.]],
                  dtype=jnp.float32).reshape(1, 1, 3, 3)
    p = jax.nn.sigmoid(pred.astype(jnp.float32))
    dn = ('NCHW', 'OIHW', 'NCHW')
    pb = lax.conv_general_dilated(p, k, (1, 1), ((1, 1), (1, 1)),
                                  dimension_numbers=dn)
    tb = lax.conv_general_dilated(target.astype(jnp.float32), k, (1, 1),
                                  ((1, 1), (1, 1)), dimension_numbers=dn)
    w = jnp.exp(theta * jnp.abs(tb))
    return jnp.mean(w * (pb - tb) ** 2)


if __name__ == "__main__":
    key = jax.random.PRNGKey(0)
    k1, k2 = jax.random.split(key)
    # Small shapes consistent with the module (C must be 1 for the 1x1x3x3
    # conv); W = 128 keeps the lane dimension aligned for in-kernel rolls.
    N, C, H, W = 2, 1, 16, 128
    pred = jax.random.normal(k1, (N, C, H, W), dtype=jnp.float32)
    target = (jax.random.uniform(k2, (N, C, H, W)) > 0.5).astype(jnp.float32)

    out = boundary_loss(pred, target)
    out = jax.block_until_ready(out)

    ref = boundary_loss_ref(pred, target)
    assert jnp.allclose(out, ref, rtol=1e-4, atol=1e-4), (float(out), float(ref))

    print("KERNEL_OK")
</pallas_src>

<mosaic_0001>
module attributes {stable_mosaic.version = 11 : i64} {
  func.func @_boundary_loss_kernel(%arg0: i32, %arg1: memref<32x128xf32, #tpu.memory_space<vmem>>, %arg2: memref<32x128xf32, #tpu.memory_space<vmem>>, %arg3: memref<1x128xf32, #tpu.memory_space<vmem>>) attributes {dimension_semantics = [#tpu.dimension_semantics<parallel>], iteration_bounds = array<i64: 1>, scalar_prefetch = 0 : i64, scratch_operands = 0 : i64, tpu.core_type = #tpu.core_type<tc>, window_params = [{transform_indices = @transform_0, window_bounds = array<i64: 32, 128>}, {transform_indices = @transform_1, window_bounds = array<i64: 32, 128>}, {transform_indices = @transform_2, window_bounds = array<i64: 1, 128>}]} {
    %c0 = arith.constant 0 : index
    %c0_0 = arith.constant 0 : index
    %0 = vector.load %arg1[%c0, %c0_0] : memref<32x128xf32, #tpu.memory_space<vmem>>, vector<32x128xf32>
    %1 = arith.negf %0 : vector<32x128xf32>
    %2 = math.exp %1 : vector<32x128xf32>
    %cst = arith.constant 1.000000e+00 : f32
    %3 = vector.broadcast %cst : f32 to vector<32x128xf32>
    %4 = arith.addf %3, %2 : vector<32x128xf32>
    %5 = arith.divf %3, %4 : vector<32x128xf32>
    %c0_1 = arith.constant 0 : index
    %c0_2 = arith.constant 0 : index
    %6 = vector.load %arg2[%c0_1, %c0_2] : memref<32x128xf32, #tpu.memory_space<vmem>>, vector<32x128xf32>
    %7 = tpu.iota {dimensions = array<i32: 0>} : vector<32x128xi32>
    %8 = tpu.iota {dimensions = array<i32: 1>} : vector<32x128xi32>
    %c16_i32 = arith.constant 16 : i32
    %c0_i32 = arith.constant 0 : i32
    %9 = arith.cmpi eq, %c16_i32, %c0_i32 : i32
    %c1_i32 = arith.constant 1 : i32
    %10 = arith.select %9, %c1_i32, %c16_i32 : i32
    %11 = vector.broadcast %10 : i32 to vector<32x128xi32>
    %12 = arith.remsi %7, %11 : vector<32x128xi32>
    %c0_i32_3 = arith.constant 0 : i32
    %13 = vector.broadcast %c0_i32_3 : i32 to vector<32x128xi32>
    %14 = arith.cmpi ne, %12, %13 : vector<32x128xi32>
    %c0_i32_4 = arith.constant 0 : i32
    %15 = vector.broadcast %c0_i32_4 : i32 to vector<32x128xi32>
    %16 = arith.cmpi slt, %12, %15 : vector<32x128xi32>
    %c0_i32_5 = arith.constant 0 : i32
    %17 = arith.cmpi slt, %10, %c0_i32_5 : i32
    %18 = vector.broadcast %17 : i1 to vector<32x128xi1>
    %19 = vector.broadcast %18 : vector<32x128xi1> to vector<32x128xi1>
    %20 = arith.xori %16, %19 : vector<32x128xi1>
    %21 = arith.andi %20, %14 : vector<32x128xi1>
    %22 = vector.broadcast %10 : i32 to vector<32x128xi32>
    %23 = arith.addi %12, %22 : vector<32x128xi32>
    %24 = arith.select %21, %23, %12 : vector<32x128xi1>, vector<32x128xi32>
    %c0_i32_6 = arith.constant 0 : i32
    %25 = vector.broadcast %c0_i32_6 : i32 to vector<32x128xi32>
    %26 = arith.cmpi sgt, %24, %25 : vector<32x128xi32>
    %27 = arith.extui %26 : vector<32x128xi1> to vector<32x128xi32>
    %28 = arith.sitofp %27 : vector<32x128xi32> to vector<32x128xf32>
    %c15_i32 = arith.constant 15 : i32
    %29 = vector.broadcast %c15_i32 : i32 to vector<32x128xi32>
    %30 = arith.cmpi slt, %24, %29 : vector<32x128xi32>
    %31 = arith.extui %30 : vector<32x128xi1> to vector<32x128xi32>
    %32 = arith.sitofp %31 : vector<32x128xi32> to vector<32x128xf32>
    %c0_i32_7 = arith.constant 0 : i32
    %33 = vector.broadcast %c0_i32_7 : i32 to vector<32x128xi32>
    %34 = arith.cmpi sgt, %8, %33 : vector<32x128xi32>
    %35 = arith.extui %34 : vector<32x128xi1> to vector<32x128xi32>
    %36 = arith.sitofp %35 : vector<32x128xi32> to vector<32x128xf32>
    %c127_i32 = arith.constant 127 : i32
    %37 = vector.broadcast %c127_i32 : i32 to vector<32x128xi32>
    %38 = arith.cmpi slt, %8, %37 : vector<32x128xi32>
    %39 = arith.extui %38 : vector<32x128xi1> to vector<32x128xi32>
    %40 = arith.sitofp %39 : vector<32x128xi32> to vector<32x128xf32>
    %c1_i32_8 = arith.constant 1 : i32
    %41 = tpu.dynamic_rotate %5 by %c1_i32_8 dim 0 : vector<32x128xf32>, i32 -> vector<32x128xf32>
    %42 = arith.mulf %28, %41 : vector<32x128xf32>
    %c31_i32 = arith.constant 31 : i32
    %43 = tpu.dynamic_rotate %5 by %c31_i32 dim 0 : vector<32x128xf32>, i32 -> vector<32x128xf32>
    %44 = arith.mulf %32, %43 : vector<32x128xf32>
    %c1_i32_9 = arith.constant 1 : i32
    %45 = tpu.dynamic_rotate %5 by %c1_i32_9 dim 1 : vector<32x128xf32>, i32 -> vector<32x128xf32>
    %46 = arith.mulf %36, %45 : vector<32x128xf32>
    %c127_i32_10 = arith.constant 127 : i32
    %47 = tpu.dynamic_rotate %5 by %c127_i32_10 dim 1 : vector<32x128xf32>, i32 -> vector<32x128xf32>
    %48 = arith.mulf %40, %47 : vector<32x128xf32>
    %49 = arith.addf %42, %44 : vector<32x128xf32>
    %50 = arith.addf %49, %46 : vector<32x128xf32>
    %51 = arith.addf %50, %48 : vector<32x128xf32>
    %cst_11 = arith.constant 4.000000e+00 : f32
    %52 = vector.broadcast %cst_11 : f32 to vector<32x128xf32>
    %53 = arith.mulf %52, %5 : vector<32x128xf32>
    %54 = arith.subf %51, %53 : vector<32x128xf32>
    %c1_i32_12 = arith.constant 1 : i32
    %55 = tpu.dynamic_rotate %6 by %c1_i32_12 dim 0 : vector<32x128xf32>, i32 -> vector<32x128xf32>
    %56 = arith.mulf %28, %55 : vector<32x128xf32>
    %c31_i32_13 = arith.constant 31 : i32
    %57 = tpu.dynamic_rotate %6 by %c31_i32_13 dim 0 : vector<32x128xf32>, i32 -> vector<32x128xf32>
    %58 = arith.mulf %32, %57 : vector<32x128xf32>
    %c1_i32_14 = arith.constant 1 : i32
    %59 = tpu.dynamic_rotate %6 by %c1_i32_14 dim 1 : vector<32x128xf32>, i32 -> vector<32x128xf32>
    %60 = arith.mulf %36, %59 : vector<32x128xf32>
    %c127_i32_15 = arith.constant 127 : i32
    %61 = tpu.dynamic_rotate %6 by %c127_i32_15 dim 1 : vector<32x128xf32>, i32 -> vector<32x128xf32>
    %62 = arith.mulf %40, %61 : vector<32x128xf32>
    %63 = arith.addf %56, %58 : vector<32x128xf32>
    %64 = arith.addf %63, %60 : vector<32x128xf32>
    %65 = arith.addf %64, %62 : vector<32x128xf32>
    %cst_16 = arith.constant 4.000000e+00 : f32
    %66 = vector.broadcast %cst_16 : f32 to vector<32x128xf32>
    %67 = arith.mulf %66, %6 : vector<32x128xf32>
    %68 = arith.subf %65, %67 : vector<32x128xf32>
    %69 = math.absf %68 : vector<32x128xf32>
    %cst_17 = arith.constant 3.000000e+00 : f32
    %70 = vector.broadcast %cst_17 : f32 to vector<32x128xf32>
    %71 = arith.mulf %70, %69 : vector<32x128xf32>
    %72 = math.exp %71 : vector<32x128xf32>
    %73 = arith.subf %54, %68 : vector<32x128xf32>
    %74 = arith.mulf %72, %73 : vector<32x128xf32>
    %75 = arith.mulf %74, %73 : vector<32x128xf32>
    %cst_18 = arith.constant dense<0.000000e+00> : vector<128xf32>
    %76 = vector.multi_reduction <add>, %75, %cst_18 [0] : vector<32x128xf32> to vector<128xf32>
    %77 = vector.shape_cast %76 : vector<128xf32> to vector<1x128xf32>
    %c0_19 = arith.constant 0 : index
    %c0_20 = arith.constant 0 : index
    %78 = vector.load %arg3[%c0_19, %c0_20] : memref<1x128xf32, #tpu.memory_space<vmem>>, vector<1x128xf32>
    tpu.vector_store %arg3[%c0_19, %c0_20], %77 {strides = array<i32>} : memref<1x128xf32, #tpu.memory_space<vmem>>, vector<1x128xf32>,
    return
  }
  func.func @transform_0(%arg0: i32) -> (i32, i32) {
    %c0_i32 = arith.constant 0 : i32
    %c0_i32_0 = arith.constant 0 : i32
    return %arg0, %c0_i32 : i32, i32
  }
  func.func @transform_1(%arg0: i32) -> (i32, i32) {
    %c0_i32 = arith.constant 0 : i32
    %c0_i32_0 = arith.constant 0 : i32
    return %arg0, %c0_i32 : i32, i32
  }
  func.func @transform_2(%arg0: i32) -> (i32, i32) {
    %c0_i32 = arith.constant 0 : i32
    %c0_i32_0 = arith.constant 0 : i32
    return %arg0, %c0_i32 : i32, i32
  }
}

</mosaic_0001>

<llo_original>
// kernel: tpu_custom_call.1
$region0: #{tpu_custom_call.1}
  #allocation0 [shape = 'u32[]', space=smem, size = 0x4, offset = 0x4, fixed_abs, tag = 'smem constant byte address 0x4 - core index']
  #allocation1 [shape = 'u32[144,128]{1,0:T(1,128)}', space=vmem, size = 0x12000, scoped, tag = 'internal scratch']
  %s0 = inlined_call_operand.hbm [shape: f32[32,128], index: 0, kind: input, shape index: {}]
  %s1 = inlined_call_operand.hbm [shape: f32[32,128], index: 1, kind: input, shape index: {}]
  %s2 = inlined_call_operand.hbm [shape: f32[1,128], index: 2, kind: output, shape index: {}]
  %s3 = sld [smem:[#allocation0]]
  $region26: #{tpu_custom_call.1} parent=0
    _
  %s5 = ssub.s32 1, %s3
  %s6 = scalar_select 0, %s5, %s3
  $region1: #{tpu_custom_call.1} parent=0
    #allocation2 [shape = 'u8[16384]{0}', space=vmem, size = 0x4000, scoped, tag = 'input window, operand 0, single buffered']
    #allocation3 [shape = 's32[1]{0}', space=sflag, size = 0x4, scoped, tag = 'scoped memory for tpu_custom_call.1']
    #allocation4 [shape = 's32[1]{0}', space=sflag, size = 0x4, scoped, tag = 'scoped memory for tpu_custom_call.1']
    #allocation5 [shape = 'u8[16384]{0}', space=vmem, size = 0x4000, scoped, tag = 'input window, operand 1, single buffered']
    #allocation6 [shape = 's32[1]{0}', space=sflag, size = 0x4, scoped, tag = 'scoped memory for tpu_custom_call.1']
    #allocation7 [shape = 'u8[512]{0}', space=vmem, size = 0x400, scoped, tag = 'output window, operand 0, single buffered']
    %7 = vsyncpa [#allocation3], 0
    %8 = vsyncpa [#allocation6], 0
    %9 = vsyncpa [#allocation4], 0
    // Predicated region
    $region2: #{tpu_custom_call.1} parent=1 // pred_check
      _
    $region3: #{tpu_custom_call.1} parent=1 // pred_check_branch
      %11 = sbr.rel (0) target = $region5
    $region4: #{tpu_custom_call.1} parent=1 // pred_region
      %s13 = ssub.s32 512, 512
      %14 = vsyncadd [#allocation3], %s13
      %s15 = sshll.u32 [#allocation2], 4
      %s16 = int_to_ptr.vmem [resolvable:$true] %s15
      %21 = dma.hbm_to_vmem [thread:$0]  %s0, 512, %s16, [#allocation3], 128, 128, 8
    $region5: #{tpu_custom_call.1} parent=1 // pred_fallthru
      _
    // Predicated region
    $region6: #{tpu_custom_call.1} parent=1 // pred_check
      _
    $region7: #{tpu_custom_call.1} parent=1 // pred_check_branch
      %23 = sbr.rel (0) target = $region9
    $region8: #{tpu_custom_call.1} parent=1 // pred_region
      %s25 = ssub.s32 512, 512
      %26 = vsyncadd [#allocation6], %s25
      %s27 = sshll.u32 [#allocation5], 4
      %s28 = int_to_ptr.vmem [resolvable:$true] %s27
      %33 = dma.hbm_to_vmem [thread:$0]  %s1, 512, %s28, [#allocation6], 128, 128, 8
    $region9: #{tpu_custom_call.1} parent=1 // pred_fallthru
      _
    // Predicated region
    $region10: #{tpu_custom_call.1} parent=1 // pred_check
      _
    $region11: #{tpu_custom_call.1} parent=1 // pred_check_branch
      %35 = sbr.rel (0) target = $region13
    $region12: #{tpu_custom_call.1} parent=1 // pred_region
      %36 = dma.done [#allocation3], 512
    $region13: #{tpu_custom_call.1} parent=1 // pred_fallthru
      _
    // Predicated region
    $region14: #{tpu_custom_call.1} parent=1 // pred_check
      _
    $region15: #{tpu_custom_call.1} parent=1 // pred_check_branch
      %38 = sbr.rel (0) target = $region17
    $region16: #{tpu_custom_call.1} parent=1 // pred_region
      %39 = dma.done [#allocation6], 512
    $region17: #{tpu_custom_call.1} parent=1 // pred_fallthru
      _
    %v40 = vld [vmem:[#allocation2] sm:$0xff]
    %v41 = vld [vmem:[#allocation2 + $0x8] sm:$0xff]
    %v42 = vld [vmem:[#allocation2 + $0x10] sm:$0xff]
    %v43 = vld [vmem:[#allocation2 + $0x18] sm:$0xff]
    %v44 = vxor.u32 %v40, 2147483648
    %v45 = vxor.u32 %v41, 2147483648
    %v46 = vxor.u32 %v42, 2147483648
    %v47 = vxor.u32 %v43, 2147483648
    %v48 = vmul.f32 %v44, 1.442695
    %v49 = vpow.pop %v48
    %v50 = vmul.f32 %v45, 1.442695
    %v51 = vpow.pop %v50
    %v52 = vmul.f32 %v46, 1.442695
    %v53 = vpow.pop %v52
    %v54 = vmul.f32 %v47, 1.442695
    %v55 = vpow.pop %v54
    %v56 = vadd.f32 %v49, 1.0
    %v57 = vadd.f32 %v51, 1.0
    %v58 = vadd.f32 %v53, 1.0
    %v59 = vadd.f32 %v55, 1.0
    %v60 = vrcp.pop %v56
    %v61 = vmul.f32 1.0, %v60
    %v62 = vrcp.pop %v57
    %v63 = vmul.f32 1.0, %v62
    %v64 = vrcp.pop %v58
    %v65 = vmul.f32 1.0, %v64
    %v66 = vrcp.pop %v59
    %v67 = vmul.f32 1.0, %v66
    %v68 = vld [vmem:[#allocation5] sm:$0xff]
    %v69 = vld [vmem:[#allocation5 + $0x8] sm:$0xff]
    %v70 = vld [vmem:[#allocation5 + $0x10] sm:$0xff]
    %v71 = vld [vmem:[#allocation5 + $0x18] sm:$0xff]
    %v72 = vlaneseq
    %v73 = vshrl.u32 %v72, 7
    %v74 = vadd.s32 %v73, 8
    %v75 = vadd.s32 %v73, 16
    %v76 = vadd.s32 %v73, 24
    %v77 = vlaneseq
    %v78 = vand.u32 %v77, 127
    %vm79 = vcmp.lt.s32.totalorder %v73, 0
    %v80 = vsub.s32 0, %v73
    %v81 = vsel %vm79, %v80, %v73
    %v82 = vshrl.u32 %v81, 4
    %v83 = vand.u32 %v81, 15
    %v84 = vsub.s32 0, %v83
    %v85 = vsel %vm79, %v84, %v83
    %vm86 = vcmp.lt.s32.totalorder %v74, 0
    %v87 = vsub.s32 0, %v74
    %v88 = vsel %vm86, %v87, %v74
    %v89 = vshrl.u32 %v88, 4
    %v90 = vand.u32 %v88, 15
    %v91 = vsub.s32 0, %v90
    %v92 = vsel %vm86, %v91, %v90
    %vm93 = vcmp.lt.s32.totalorder %v75, 0
    %v94 = vsub.s32 0, %v75
    %v95 = vsel %vm93, %v94, %v75
    %v96 = vshrl.u32 %v95, 4
    %v97 = vand.u32 %v95, 15
    %v98 = vsub.s32 0, %v97
    %v99 = vsel %vm93, %v98, %v97
    %vm100 = vcmp.lt.s32.totalorder %v76, 0
    %v101 = vsub.s32 0, %v76
    %v102 = vsel %vm100, %v101, %v76
    %v103 = vshrl.u32 %v102, 4
    %v104 = vand.u32 %v102, 15
    %v105 = vsub.s32 0, %v104
    %v106 = vsel %vm100, %v105, %v104
    %vm107 = vcmp.ne.s32.totalorder %v85, 0
    %vm108 = vcmp.ne.s32.totalorder %v92, 0
    %vm109 = vcmp.ne.s32.totalorder %v99, 0
    %vm110 = vcmp.ne.s32.totalorder %v106, 0
    %vm111 = vcmp.lt.s32.totalorder %v85, 0
    %vm112 = vcmp.lt.s32.totalorder %v92, 0
    %vm113 = vcmp.lt.s32.totalorder %v99, 0
    %vm114 = vcmp.lt.s32.totalorder %v106, 0
    %vm115 = vmand %vm111, %vm107
    %vm116 = vmand %vm112, %vm108
    %vm117 = vmand %vm113, %vm109
    %vm118 = vmand %vm114, %vm110
    %v119 = vadd.s32 %v85, 16
    %v120 = vadd.s32 %v92, 16
    %v121 = vadd.s32 %v99, 16
    %v122 = vadd.s32 %v106, 16
    %v123 = vsel %vm115, %v119, %v85
    %v124 = vsel %vm116, %v120, %v92
    %v125 = vsel %vm117, %v121, %v99
    %v126 = vsel %vm118, %v122, %v106
    %vm127 = vcmp.gt.s32.totalorder %v123, 0
    %vm128 = vcmp.gt.s32.totalorder %v124, 0
    %vm129 = vcmp.gt.s32.totalorder %v125, 0
    %vm130 = vcmp.gt.s32.totalorder %v126, 0
    %v131 = vsel %vm127, 1, 0
    %v132 = vsel %vm128, 1, 0
    %v133 = vsel %vm129, 1, 0
    %v134 = vsel %vm130, 1, 0
    %v135 = vcvt.s32.f32 %v131
    %v136 = vcvt.s32.f32 %v132
    %v137 = vcvt.s32.f32 %v133
    %v138 = vcvt.s32.f32 %v134
    %vm139 = vcmp.lt.s32.totalorder %v123, 15
    %vm140 = vcmp.lt.s32.totalorder %v124, 15
    %vm141 = vcmp.lt.s32.totalorder %v125, 15
    %vm142 = vcmp.lt.s32.totalorder %v126, 15
    %v143 = vsel %vm139, 1, 0
    %v144 = vsel %vm140, 1, 0
    %v145 = vsel %vm141, 1, 0
    %v146 = vsel %vm142, 1, 0
    %v147 = vcvt.s32.f32 %v143
    %v148 = vcvt.s32.f32 %v144
    %v149 = vcvt.s32.f32 %v145
    %v150 = vcvt.s32.f32 %v146
    %vm151 = vcmp.gt.s32.totalorder %v78, 0
    %v152 = vsel %vm151, 1, 0
    %v153 = vcvt.s32.f32 %v152
    %vm154 = vcmp.lt.s32.totalorder %v78, 127
    %v155 = vsel %vm154, 1, 0
    %v156 = vcvt.s32.f32 %v155
    %v157 = vrot.slane %v61, 7
    %v158 = vrot.slane %v63, 7
    %v159 = vrot.slane %v65, 7
    %v160 = vrot.slane %v67, 7
    %vm161 = vcmp.lt.s32.totalorder %v73, 1
    %v162 = vsel %vm161, %v159, %v160
    %v163 = vsel %vm161, %v158, %v159
    %v164 = vsel %vm161, %v157, %v158
    %v165 = vsel %vm161, %v160, %v157
    %v166 = vmul.f32 %v135, %v165
    %v167 = vmul.f32 %v136, %v164
    %v168 = vmul.f32 %v137, %v163
    %v169 = vmul.f32 %v138, %v162
    %v170 = vrot.slane %v61, 1
    %v171 = vrot.slane %v63, 1
    %v172 = vrot.slane %v65, 1
    %v173 = vrot.slane %v67, 1
    %vm174 = vcmp.lt.s32.totalorder %v73, 7
    %v175 = vsel %vm174, %v172, %v173
    %v176 = vsel %vm174, %v171, %v172
    %v177 = vsel %vm174, %v170, %v171
    %v178 = vsel %vm174, %v173, %v170
    %v179 = vmul.f32 %v147, %v177
    %v180 = vmul.f32 %v148, %v176
    %v181 = vmul.f32 %v149, %v175
    %v182 = vmul.f32 %v150, %v178
    %183 = vrot.lane.b32.xlu0 %v61, 1
    %v184 = vpop.permute.xlu0 %183
    %185 = vrot.lane.b32.xlu0 %v63, 1
    %v186 = vpop.permute.xlu0 %185
    %187 = vrot.lane.b32.xlu0 %v65, 1
    %v188 = vpop.permute.xlu0 %187
    %189 = vrot.lane.b32.xlu0 %v67, 1
    %v190 = vpop.permute.xlu0 %189
    %v191 = vmul.f32 %v153, %v184
    %v192 = vmul.f32 %v153, %v186
    %v193 = vmul.f32 %v153, %v188
    %v194 = vmul.f32 %v153, %v190
    %195 = vrot.lane.b32.xlu0 %v61, 127
    %v196 = vpop.permute.xlu0 %195
    %197 = vrot.lane.b32.xlu0 %v63, 127
    %v198 = vpop.permute.xlu0 %197
    %199 = vrot.lane.b32.xlu0 %v65, 127
    %v200 = vpop.permute.xlu0 %199
    %201 = vrot.lane.b32.xlu0 %v67, 127
    %v202 = vpop.permute.xlu0 %201
    %v203 = vmul.f32 %v156, %v196
    %v204 = vmul.f32 %v156, %v198
    %v205 = vmul.f32 %v156, %v200
    %v206 = vmul.f32 %v156, %v202
    %v207 = vadd.f32 %v166, %v179
    %v208 = vadd.f32 %v167, %v180
    %v209 = vadd.f32 %v168, %v181
    %v210 = vadd.f32 %v169, %v182
    %v211 = vadd.f32 %v207, %v191
    %v212 = vadd.f32 %v208, %v192
    %v213 = vadd.f32 %v209, %v193
    %v214 = vadd.f32 %v210, %v194
    %v215 = vadd.f32 %v211, %v203
    %v216 = vadd.f32 %v212, %v204
    %v217 = vadd.f32 %v213, %v205
    %v218 = vadd.f32 %v214, %v206
    %v219 = vmul.f32 %v61, 4.0
    %v220 = vmul.f32 %v63, 4.0
    %v221 = vmul.f32 %v65, 4.0
    %v222 = vmul.f32 %v67, 4.0
    %v223 = vsub.f32 %v215, %v219
    %v224 = vsub.f32 %v216, %v220
    %v225 = vsub.f32 %v217, %v221
    %v226 = vsub.f32 %v218, %v222
    %v227 = vrot.slane %v68, 7
    %v228 = vrot.slane %v69, 7
    %v229 = vrot.slane %v70, 7
    %v230 = vrot.slane %v71, 7
    %v231 = vsel %vm161, %v229, %v230
    %v232 = vsel %vm161, %v228, %v229
    %v233 = vsel %vm161, %v227, %v228
    %v234 = vsel %vm161, %v230, %v227
    %v235 = vmul.f32 %v135, %v234
    %v236 = vmul.f32 %v136, %v233
    %v237 = vmul.f32 %v137, %v232
    %v238 = vmul.f32 %v138, %v231
    %v239 = vrot.slane %v68, 1
    %v240 = vrot.slane %v69, 1
    %v241 = vrot.slane %v70, 1
    %v242 = vrot.slane %v71, 1
    %v243 = vsel %vm174, %v241, %v242
    %v244 = vsel %vm174, %v240, %v241
    %v245 = vsel %vm174, %v239, %v240
    %v246 = vsel %vm174, %v242, %v239
    %v247 = vmul.f32 %v147, %v245
    %v248 = vmul.f32 %v148, %v244
    %v249 = vmul.f32 %v149, %v243
    %v250 = vmul.f32 %v150, %v246
    %251 = vrot.lane.b32.xlu0 %v68, 1
    %v252 = vpop.permute.xlu0 %251
    %253 = vrot.lane.b32.xlu0 %v69, 1
    %v254 = vpop.permute.xlu0 %253
    %255 = vrot.lane.b32.xlu0 %v70, 1
    %v256 = vpop.permute.xlu0 %255
    %257 = vrot.lane.b32.xlu0 %v71, 1
    %v258 = vpop.permute.xlu0 %257
    %v259 = vmul.f32 %v153, %v252
    %v260 = vmul.f32 %v153, %v254
    %v261 = vmul.f32 %v153, %v256
    %v262 = vmul.f32 %v153, %v258
    %263 = vrot.lane.b32.xlu0 %v68, 127
    %v264 = vpop.permute.xlu0 %263
    %265 = vrot.lane.b32.xlu0 %v69, 127
    %v266 = vpop.permute.xlu0 %265
    %267 = vrot.lane.b32.xlu0 %v70, 127
    %v268 = vpop.permute.xlu0 %267
    %269 = vrot.lane.b32.xlu0 %v71, 127
    %v270 = vpop.permute.xlu0 %269
    %v271 = vmul.f32 %v156, %v264
    %v272 = vmul.f32 %v156, %v266
    %v273 = vmul.f32 %v156, %v268
    %v274 = vmul.f32 %v156, %v270
    %v275 = vadd.f32 %v235, %v247
    %v276 = vadd.f32 %v236, %v248
    %v277 = vadd.f32 %v237, %v249
    %v278 = vadd.f32 %v238, %v250
    %v279 = vadd.f32 %v275, %v259
    %v280 = vadd.f32 %v276, %v260
    %v281 = vadd.f32 %v277, %v261
    %v282 = vadd.f32 %v278, %v262
    %v283 = vadd.f32 %v279, %v271
    %v284 = vadd.f32 %v280, %v272
    %v285 = vadd.f32 %v281, %v273
    %v286 = vadd.f32 %v282, %v274
    %v287 = vmul.f32 %v68, 4.0
    %v288 = vmul.f32 %v69, 4.0
    %v289 = vmul.f32 %v70, 4.0
    %v290 = vmul.f32 %v71, 4.0
    %v291 = vsub.f32 %v283, %v287
    %v292 = vsub.f32 %v284, %v288
    %v293 = vsub.f32 %v285, %v289
    %v294 = vsub.f32 %v286, %v290
    %v295 = vand.u32 2147483647, %v291
    %v296 = vand.u32 2147483647, %v292
    %v297 = vand.u32 2147483647, %v293
    %v298 = vand.u32 2147483647, %v294
    %v299 = vmul.f32 %v295, 3.0
    %v300 = vmul.f32 %v296, 3.0
    %v301 = vmul.f32 %v297, 3.0
    %v302 = vmul.f32 %v298, 3.0
    %v303 = vmul.f32 %v299, 1.442695
    %v304 = vpow.pop %v303
    %v305 = vmul.f32 %v300, 1.442695
    %v306 = vpow.pop %v305
    %v307 = vmul.f32 %v301, 1.442695
    %v308 = vpow.pop %v307
    %v309 = vmul.f32 %v302, 1.442695
    %v310 = vpow.pop %v309
    %v311 = vsub.f32 %v223, %v291
    %v312 = vsub.f32 %v224, %v292
    %v313 = vsub.f32 %v225, %v293
    %v314 = vsub.f32 %v226, %v294
    %v315 = vmul.f32 %v304, %v311
    %v316 = vmul.f32 %v306, %v312
    %v317 = vmul.f32 %v308, %v313
    %v318 = vmul.f32 %v310, %v314
    %v319 = vmul.f32 %v315, %v311
    %v320 = vmul.f32 %v316, %v312
    %v321 = vmul.f32 %v317, %v313
    %v322 = vmul.f32 %v318, %v314
    %v323 = vadd.f32 %v319, %v320
    %v324 = vadd.f32 %v323, %v321
    %v325 = vadd.f32 %v324, %v322
    %v326 = vrot.slane %v325, 4
    %v327 = vadd.f32 %v325, %v326
    %v328 = vrot.slane %v327, 2
    %v329 = vadd.f32 %v327, %v328
    %v330 = vrot.slane %v329, 1
    %v331 = vadd.f32 %v329, %v330
    %332 = vst [vmem:[#allocation7] sm:$0x1] %v331
    // Predicated region
    $region18: #{tpu_custom_call.1} parent=1 // pred_check
      _
    $region19: #{tpu_custom_call.1} parent=1 // pred_check_branch
      %334 = sbr.rel (0) target = $region21
    $region20: #{tpu_custom_call.1} parent=1 // pred_region
      %s336 = ssub.s32 16, 16
      %337 = vsyncadd [#allocation4], %s336
      %s339 = sshll.u32 [#allocation7], 4
      %s340 = int_to_ptr.vmem [resolvable:$true] %s339
      %342 = dma.vmem_to_hbm [thread:$0]  %s340, 16, %s2, [#allocation4]
    $region21: #{tpu_custom_call.1} parent=1 // pred_fallthru
      _
    // Predicated region
    $region22: #{tpu_custom_call.1} parent=1 // pred_check
      _
    $region23: #{tpu_custom_call.1} parent=1 // pred_check_branch
      %344 = sbr.rel (0) target = $region25
    $region24: #{tpu_custom_call.1} parent=1 // pred_region
      %345 = dma.done [#allocation4], 16
    $region25: #{tpu_custom_call.1} parent=1 // pred_fallthru
      _
    %346 = vsyncpa [#allocation3], 1
    %347 = vsyncpa [#allocation6], 1
    %348 = vsyncpa [#allocation4], 1

</llo_original>
